<compile_context>
chip_gen: v7x
topology: tpu7x:2x2x1
jax: 0.10.0
libtpu: 0.0.40
codegen_flags: <defaults>
</compile_context>

<pallas_src>
import functools

import jax
import jax.numpy as jnp
from jax.experimental import pallas as pl
from jax.experimental.pallas import tpu as pltpu


def _gat_final_kernel(x_ref, adj_ref, w_big_ref, w2_big_ref, o_ref, *,
                      num_heads: int, dim_hidden: int, dim_out: int, alpha: float):
    """Fused GAT_Final forward for a block of bt batch elements.

    x_ref      : (bt, N, Din)          node features
    adj_ref    : (bt, N, N)  float     adjacency (>0 means edge)
    w_big_ref  : (Din, H*Dh + 2H)      [W_all | W_all @ A_packed]
    w2_big_ref : (H*Dh, Dout + 2)      [W2 | W2 @ [a1|a2]]
    o_ref      : (bt, N*Dout)          lane-dense output slab
    """
    bt, n, din = x_ref.shape
    hdh = num_heads * dim_hidden
    neg_inf = jnp.float32(-9e15)
    mxu_dtype = w_big_ref.dtype

    # Edge mask: computed once per block (no host-side int8 pass, no per-b cast).
    edge = adj_ref[...] > 0.0                                         # (bt, n, n) bool

    # One wide projection for all heads AND their attention-score features.
    x2 = x_ref[...].reshape(bt * n, din).astype(mxu_dtype)
    whf = jnp.dot(x2, w_big_ref[...], preferred_element_type=jnp.float32)
    wh = whf[:, :hdh]                                                 # (bt*n, H*Dh) f32
    f3 = whf[:, hdh:].reshape(bt, n, 2 * num_heads)                   # (bt, n, 2H)

    def masked_softmax(e):
        # e: (bt, n, n). LeakyReLU -> mask -> stable softmax (unnormalized p, 1/l).
        e = jnp.where(e > 0, e, alpha * e)
        e = jnp.where(edge, e, neg_inf)
        e = e - jnp.max(e, axis=-1, keepdims=True)
        p = jnp.exp(e)
        inv_l = pl.reciprocal(jnp.sum(p, axis=-1, keepdims=True), approx=True)
        return p, inv_l

    # ---- MHA layer (concat=True, ELU). Only a tiny static unroll over heads
    # remains; every op inside is batched over the whole (bt, n, n) slab.
    # TODO(synk): with N=8 each (n,n) slab uses only 8 of 128 lanes; packing
    # several graphs block-diagonally along lanes would raise VPU/EUP utilization.
    heads = []
    for h in range(num_heads):
        f1 = f3[:, :, h:h + 1]                                        # (bt, n, 1)
        f2 = f3[:, :, num_heads + h:num_heads + h + 1]                # (bt, n, 1)
        p, inv_l = masked_softmax(f1 + jnp.swapaxes(f2, -1, -2))      # (bt, n, n)
        attn = p * inv_l
        # TODO(synk): F.dropout on attn / inputs is identity here (eval mode, no RNG mask).
        vals = wh[:, h * dim_hidden:(h + 1) * dim_hidden].reshape(bt, n, dim_hidden)
        hh = jnp.einsum("bij,bjd->bid", attn, vals,
                        preferred_element_type=jnp.float32)           # (bt, n, Dh)
        # ELU; exp(h)-1 (vs expm1) differs by <1e-7 abs at f32, kept for
        # guaranteed Mosaic lowering.
        heads.append(jnp.where(hh > 0, hh, jnp.exp(hh) - 1.0))
    xm = jnp.concatenate(heads, axis=-1).reshape(bt * n, hdh)         # (bt*n, H*Dh)

    # ---- Output GAT layer (concat=False): one (bt*n, H*Dh) x (H*Dh, Dout+2)
    # matmul yields both Wh2 and its two attention-score features.
    whf2 = jnp.dot(xm.astype(mxu_dtype), w2_big_ref[...],
                   preferred_element_type=jnp.float32)                # (bt*n, Dout+2)
    g1 = whf2[:, dim_out:dim_out + 1].reshape(bt, n, 1)
    g2 = whf2[:, dim_out + 1:dim_out + 2].reshape(bt, n, 1)
    p2, inv_l2 = masked_softmax(g1 + jnp.swapaxes(g2, -1, -2))        # (bt, n, n)

    if dim_out == 1:
        # Lane-dense epilogue: out[b,i] = (sum_j p2[b,i,j]*wh2[b,j]) / l2[b,i]
        # (avoids a degenerate K=n, 1-lane-output MXU call and a 1-lane store).
        wh2_row = jnp.swapaxes(whf2[:, 0:1].reshape(bt, n, 1), -1, -2)    # (bt, 1, n)
        out = jnp.sum(p2 * wh2_row, axis=-1, keepdims=True) * inv_l2      # (bt, n, 1)
        out = jnp.swapaxes(out, -1, -2).reshape(bt, n)                    # (bt, n)
        o_ref[...] = out.astype(o_ref.dtype)
    else:
        attn2 = p2 * inv_l2
        wh2 = whf2[:, :dim_out].reshape(bt, n, dim_out)
        out = jnp.einsum("bij,bjd->bid", attn2, wh2,
                         preferred_element_type=jnp.float32)
        o_ref[...] = out.reshape(bt, n * dim_out).astype(o_ref.dtype)


def _estimate_vmem_bytes(bt, n, din, num_heads, dim_hidden, dim_out, mxu_bytes=4):
    """Generous upper bound on per-step VMEM use (I/O double-buffers + intermediates)."""
    f32 = 4
    hdh = num_heads * dim_hidden
    io = 2 * (bt * n * din * f32 + bt * n * n * f32 + bt * n * dim_out * f32)
    weights = 2 * ((din * (hdh + 2 * num_heads) + hdh * (dim_out + 2)) * mxu_bytes)
    inter = bt * n * (hdh + 2 * num_heads) * f32            # whf
    inter += 4 * num_heads * bt * n * n * f32               # per-head e/p/attn slabs
    inter += 3 * bt * n * hdh * f32                         # head outputs, xm, casts
    inter += 4 * bt * n * n * f32                           # output-layer e2/p2 slabs
    inter += 2 * bt * n * (dim_out + 2) * f32
    return io + weights + inter


def _pick_batch_block(batch, n, din, num_heads, dim_hidden, dim_out,
                      vmem_budget_bytes=8 * 1024 * 1024, max_bt=1024):
    """VMEM-aware batch-block picker.

    - bt must divide batch and satisfy (bt == batch or bt % 8 == 0) so the 2-D
      output block (bt, n*dim_out) keeps an aligned / full sublane extent.
    - take the largest bt whose estimated VMEM footprint fits the budget
      (fewer grid steps -> less per-step overhead, bigger MXU M dimension).
    - if that leaves an odd number (>1) of steps, prefer the largest alternative
      with an even step count (v7x shards the parallel axis over 2 TensorCores).
    """
    cands = []
    for bt in range(1, min(batch, max_bt) + 1):
        if batch % bt:
            continue
        if bt != batch and bt % 8:
            continue
        if _estimate_vmem_bytes(bt, n, din, num_heads, dim_hidden, dim_out) > vmem_budget_bytes:
            continue
        cands.append(bt)
    if not cands:
        aligned = [bt for bt in range(8, batch, 8) if batch % bt == 0]
        return min(aligned) if aligned else batch
    bt = max(cands)
    steps = batch // bt
    if steps > 1 and steps % 2:
        even = [c for c in cands if (batch // c) % 2 == 0 and c * n >= 128]
        if even:
            bt = max(even)
    return bt


def pack_gat_params(params, matmul_dtype=jnp.bfloat16):
    """Fold the attention-score vectors into the projection weights (once, host-side)."""
    heads = params["mha"]
    num_heads = len(heads)
    dim_hidden = heads[0][0].shape[1]
    w1 = jnp.concatenate([w for (w, _, _) in heads], axis=1)          # (Din, H*Dh)
    ap1 = jnp.zeros((num_heads * dim_hidden, 2 * num_heads), jnp.float32)
    for h, (_, a1, a2) in enumerate(heads):
        ap1 = ap1.at[h * dim_hidden:(h + 1) * dim_hidden, h].set(a1[:, 0])
        ap1 = ap1.at[h * dim_hidden:(h + 1) * dim_hidden, num_heads + h].set(a2[:, 0])
    # (x @ w1) @ ap1 == x @ (w1 @ ap1): one wide matmul per layer in the kernel.
    w_big = jnp.concatenate([w1, w1 @ ap1], axis=1)                   # (Din, H*Dh + 2H)
    w2, b1, b2 = params["gat"]
    ap2 = jnp.concatenate([b1, b2], axis=1)                           # (Dout, 2)
    w2_big = jnp.concatenate([w2, w2 @ ap2], axis=1)                  # (H*Dh, Dout + 2)
    return {"w_big": w_big.astype(matmul_dtype),
            "w2_big": w2_big.astype(matmul_dtype),
            "num_heads": num_heads, "dim_hidden": dim_hidden, "dim_out": w2.shape[1]}


def gat_final_forward(x, adj, packed, *, alpha=0.2):
    """GAT_Final.forward (graph_gat_arch='mha_gat') as one fused pallas_call."""
    B, N, Din = x.shape
    num_heads = packed["num_heads"]
    dim_hidden = packed["dim_hidden"]
    dim_out = packed["dim_out"]
    hdh = num_heads * dim_hidden

    bt = _pick_batch_block(B, N, Din, num_heads, dim_hidden, dim_out)

    kernel = functools.partial(_gat_final_kernel, num_heads=num_heads,
                               dim_hidden=dim_hidden, dim_out=dim_out, alpha=alpha)
    out_flat = pl.pallas_call(
        kernel,
        out_shape=jax.ShapeDtypeStruct((B, N * dim_out), x.dtype),
        grid=(B // bt,),
        in_specs=[
            pl.BlockSpec((bt, N, Din), lambda b: (b, 0, 0)),
            pl.BlockSpec((bt, N, N), lambda b: (b, 0, 0)),
            pl.BlockSpec((Din, hdh + 2 * num_heads), lambda b: (0, 0)),
            pl.BlockSpec((hdh, dim_out + 2), lambda b: (0, 0)),
        ],
        out_specs=pl.BlockSpec((bt, N * dim_out), lambda b: (b, 0)),
        compiler_params=pltpu.CompilerParams(
            dimension_semantics=("parallel",),
            vmem_limit_bytes=32 * 1024 * 1024,
        ),
    )(x, adj, packed["w_big"], packed["w2_big"])
    return out_flat.reshape(B, N, dim_out)


def init_params(key, dim_in, dim_hidden, dim_out, num_heads):
    """Deterministic xavier-uniform style init matching the layer shapes."""
    params = {"mha": [], "gat": None}

    def xavier(k, shape):
        fan_in, fan_out = shape[0], shape[1]
        lim = jnp.sqrt(6.0 / (fan_in + fan_out))
        return jax.random.uniform(k, shape, jnp.float32, -lim, lim)

    for _ in range(num_heads):
        k1, k2, key = jax.random.split(key, 3)
        W = xavier(k1, (dim_in, dim_hidden))
        a = xavier(k2, (2 * dim_hidden, 1))
        params["mha"].append((W, a[:dim_hidden], a[dim_hidden:]))

    k1, k2, key = jax.random.split(key, 3)
    d_mid = dim_hidden * num_heads
    W = xavier(k1, (d_mid, dim_out))
    a = xavier(k2, (2 * dim_out, 1))
    params["gat"] = (W, a[:dim_out], a[dim_out:])
    return params


def _reference_layer(x, adj, w, a1, a2, alpha, apply_elu):
    """Pure-jnp reference of GraphAttentionLayer (for correctness check)."""
    wh = jnp.einsum("bnd,de->bne", x, w)
    f1 = jnp.einsum("bne,eo->bno", wh, a1)
    f2 = jnp.einsum("bne,eo->bno", wh, a2)
    e = f1 + jnp.swapaxes(f2, -1, -2)
    e = jnp.where(e > 0, e, alpha * e)
    e = jnp.where(adj > 0, e, -9e15)
    attn = jax.nn.softmax(e, axis=-1)
    h = jnp.einsum("bnm,bme->bne", attn, wh)
    return jnp.where(h > 0, h, jnp.expm1(h)) if apply_elu else h


def _reference_forward(x, adj, params, alpha=0.2):
    heads = [_reference_layer(x, adj, W, a1, a2, alpha, True)
             for (W, a1, a2) in params["mha"]]
    x = jnp.concatenate(heads, axis=-1)
    W, a1, a2 = params["gat"]
    return _reference_layer(x, adj, W, a1, a2, alpha, False)


if __name__ == "__main__":
    B, N, DIM_IN, DIM_HIDDEN, DIM_OUT, NUM_HEADS = 2, 8, 16, 32, 1, 2

    key = jax.random.PRNGKey(0)
    kx, kadj, kparams = jax.random.split(key, 3)

    x = jax.random.normal(kx, (B, N, DIM_IN), dtype=jnp.float32)
    # random adjacency with self-loops so no row is fully masked
    adj = (jax.random.uniform(kadj, (B, N, N)) > 0.5).astype(jnp.float32)
    adj = jnp.maximum(adj, jnp.eye(N, dtype=jnp.float32)[None])

    params = init_params(kparams, DIM_IN, DIM_HIDDEN, DIM_OUT, NUM_HEADS)
    ref = jax.block_until_ready(_reference_forward(x, adj, params))

    # 1) Exact-dtype path (f32 MXU operands): tight tolerance
    #    (only pl.reciprocal(approx=True) + exp-1 ELU + prefolded w@a rounding differ).
    packed_f32 = pack_gat_params(params, matmul_dtype=jnp.float32)
    out_f32 = jax.block_until_ready(gat_final_forward(x, adj, packed_f32))
    assert out_f32.shape == (B, N, DIM_OUT), out_f32.shape
    assert jnp.allclose(out_f32, ref, atol=2e-3, rtol=2e-3), "f32-mode mismatch vs reference"

    # 2) bf16 MXU-operand fast path (recommended for v6e/v7x, valid on v5e's MXU);
    #    elementwise math stays f32, so only bf16 operand rounding loosens tolerance.
    packed_bf16 = pack_gat_params(params, matmul_dtype=jnp.bfloat16)
    out_bf16 = jax.block_until_ready(gat_final_forward(x, adj, packed_bf16))
    assert out_bf16.shape == (B, N, DIM_OUT), out_bf16.shape
    assert jnp.allclose(out_bf16, ref, atol=5e-2, rtol=5e-2), "bf16-mode mismatch vs reference"

    print("KERNEL_OK")
</pallas_src>

<mosaic_0001>
module attributes {stable_mosaic.version = 11 : i64} {
  func.func @_gat_final_kernel(%arg0: i32, %arg1: memref<2x8x16xf32, #tpu.memory_space<vmem>>, %arg2: memref<2x8x8xf32, #tpu.memory_space<vmem>>, %arg3: memref<16x68xf32, #tpu.memory_space<vmem>>, %arg4: memref<64x3xf32, #tpu.memory_space<vmem>>, %arg5: memref<2x8xf32, #tpu.memory_space<vmem>>) attributes {dimension_semantics = [#tpu.dimension_semantics<parallel>], iteration_bounds = array<i64: 1>, scalar_prefetch = 0 : i64, scratch_operands = 0 : i64, tpu.core_type = #tpu.core_type<tc>, window_params = [{transform_indices = @transform_0, window_bounds = array<i64: 2, 8, 16>}, {transform_indices = @transform_1, window_bounds = array<i64: 2, 8, 8>}, {pipeline_mode = #tpu.pipeline_mode<synchronous>, transform_indices = @transform_2, window_bounds = array<i64: 16, 68>}, {pipeline_mode = #tpu.pipeline_mode<synchronous>, transform_indices = @transform_3, window_bounds = array<i64: 64, 3>}, {transform_indices = @transform_4, window_bounds = array<i64: 2, 8>}]} {
    %c0 = arith.constant 0 : index
    %c0_0 = arith.constant 0 : index
    %c0_1 = arith.constant 0 : index
    %0 = vector.load %arg2[%c0, %c0_0, %c0_1] : memref<2x8x8xf32, #tpu.memory_space<vmem>>, vector<2x8x8xf32>
    %cst = arith.constant 0.000000e+00 : f32
    %1 = vector.broadcast %cst : f32 to vector<2x8x8xf32>
    %2 = arith.cmpf ogt, %0, %1 : vector<2x8x8xf32>
    %c0_2 = arith.constant 0 : index
    %c0_3 = arith.constant 0 : index
    %c0_4 = arith.constant 0 : index
    %3 = vector.load %arg1[%c0_2, %c0_3, %c0_4] : memref<2x8x16xf32, #tpu.memory_space<vmem>>, vector<2x8x16xf32>
    %4 = vector.shape_cast %3 : vector<2x8x16xf32> to vector<16x16xf32>
    %c0_5 = arith.constant 0 : index
    %c0_6 = arith.constant 0 : index
    %5 = vector.load %arg3[%c0_5, %c0_6] : memref<16x68xf32, #tpu.memory_space<vmem>>, vector<16x68xf32>
    %cst_7 = arith.constant dense<0.000000e+00> : vector<16x68xf32>
    %6 = tpu.matmul %4, %5, %cst_7 {dimension_numbers = #tpu.dot_dimension_numbers<[1], [0], [0], [1], [0, 0, 1, 1], [], []>} : vector<16x16xf32>, vector<16x68xf32>, vector<16x68xf32> -> vector<16x68xf32>
    %7 = vector.extract_strided_slice %6 {offsets = [0, 0], sizes = [16, 64], strides = [1, 1]} : vector<16x68xf32> to vector<16x64xf32>
    %8 = vector.extract_strided_slice %6 {offsets = [0, 64], sizes = [16, 4], strides = [1, 1]} : vector<16x68xf32> to vector<16x4xf32>
    %9 = vector.shape_cast %8 : vector<16x4xf32> to vector<2x8x4xf32>
    %10 = vector.extract_strided_slice %9 {offsets = [0, 0, 0], sizes = [2, 8, 1], strides = [1, 1, 1]} : vector<2x8x4xf32> to vector<2x8x1xf32>
    %11 = vector.extract_strided_slice %9 {offsets = [0, 0, 2], sizes = [2, 8, 1], strides = [1, 1, 1]} : vector<2x8x4xf32> to vector<2x8x1xf32>
    %12 = tpu.transpose %11, [0, 2, 1] : vector<2x8x1xf32> -> vector<2x1x8xf32>
    %13 = vector.broadcast %10 : vector<2x8x1xf32> to vector<2x8x8xf32>
    %14 = vector.broadcast %12 : vector<2x1x8xf32> to vector<2x8x8xf32>
    %15 = arith.addf %13, %14 : vector<2x8x8xf32>
    %cst_8 = arith.constant 0.000000e+00 : f32
    %16 = vector.broadcast %cst_8 : f32 to vector<2x8x8xf32>
    %17 = arith.cmpf ogt, %15, %16 : vector<2x8x8xf32>
    %cst_9 = arith.constant 2.000000e-01 : f32
    %18 = vector.broadcast %cst_9 : f32 to vector<2x8x8xf32>
    %19 = arith.mulf %18, %15 : vector<2x8x8xf32>
    %20 = arith.select %17, %15, %19 : vector<2x8x8xi1>, vector<2x8x8xf32>
    %cst_10 = arith.constant -9.000000e+15 : f32
    %21 = vector.broadcast %cst_10 : f32 to vector<2x8x8xf32>
    %22 = arith.select %2, %20, %21 : vector<2x8x8xi1>, vector<2x8x8xf32>
    %cst_11 = arith.constant dense<0xFF800000> : vector<2x8xf32>
    %23 = vector.multi_reduction <maximumf>, %22, %cst_11 [2] : vector<2x8x8xf32> to vector<2x8xf32>
    %24 = vector.shape_cast %23 : vector<2x8xf32> to vector<2x8x1xf32>
    %25 = vector.broadcast %24 : vector<2x8x1xf32> to vector<2x8x8xf32>
    %26 = arith.subf %22, %25 : vector<2x8x8xf32>
    %27 = math.exp %26 : vector<2x8x8xf32>
    %cst_12 = arith.constant dense<0.000000e+00> : vector<2x8xf32>
    %28 = vector.multi_reduction <add>, %27, %cst_12 [2] : vector<2x8x8xf32> to vector<2x8xf32>
    %29 = vector.shape_cast %28 : vector<2x8xf32> to vector<2x8x1xf32>
    %30 = tpu.reciprocal %29 {approx = true} : vector<2x8x1xf32> -> vector<2x8x1xf32>
    %31 = vector.broadcast %30 : vector<2x8x1xf32> to vector<2x8x8xf32>
    %32 = arith.mulf %27, %31 : vector<2x8x8xf32>
    %33 = vector.extract_strided_slice %7 {offsets = [0, 0], sizes = [16, 32], strides = [1, 1]} : vector<16x64xf32> to vector<16x32xf32>
    %34 = vector.shape_cast %33 : vector<16x32xf32> to vector<2x8x32xf32>
    "tpu.trace_start"() <{level = 10 : i32, message = "bij,bjd->bid"}> : () -> ()
    %cst_13 = arith.constant dense<0.000000e+00> : vector<2x8x32xf32>
    %35 = tpu.matmul %32, %34, %cst_13 {dimension_numbers = #tpu.dot_dimension_numbers<[2], [1], [1], [2], [0, 0, 0, 1, 1, 2], [0], [0]>} : vector<2x8x8xf32>, vector<2x8x32xf32>, vector<2x8x32xf32> -> vector<2x8x32xf32>
    %cst_14 = arith.constant 0.000000e+00 : f32
    "tpu.trace_stop"() : () -> ()
    %36 = vector.broadcast %cst_14 : f32 to vector<2x8x32xf32>
    %37 = arith.cmpf ogt, %35, %36 : vector<2x8x32xf32>
    %38 = math.exp %35 : vector<2x8x32xf32>
    %cst_15 = arith.constant 1.000000e+00 : f32
    %39 = vector.broadcast %cst_15 : f32 to vector<2x8x32xf32>
    %40 = arith.subf %38, %39 : vector<2x8x32xf32>
    %41 = arith.select %37, %35, %40 : vector<2x8x32xi1>, vector<2x8x32xf32>
    %42 = vector.extract_strided_slice %9 {offsets = [0, 0, 1], sizes = [2, 8, 1], strides = [1, 1, 1]} : vector<2x8x4xf32> to vector<2x8x1xf32>
    %43 = vector.extract_strided_slice %9 {offsets = [0, 0, 3], sizes = [2, 8, 1], strides = [1, 1, 1]} : vector<2x8x4xf32> to vector<2x8x1xf32>
    %44 = tpu.transpose %43, [0, 2, 1] : vector<2x8x1xf32> -> vector<2x1x8xf32>
    %45 = vector.broadcast %42 : vector<2x8x1xf32> to vector<2x8x8xf32>
    %46 = vector.broadcast %44 : vector<2x1x8xf32> to vector<2x8x8xf32>
    %47 = arith.addf %45, %46 : vector<2x8x8xf32>
    %cst_16 = arith.constant 0.000000e+00 : f32
    %48 = vector.broadcast %cst_16 : f32 to vector<2x8x8xf32>
    %49 = arith.cmpf ogt, %47, %48 : vector<2x8x8xf32>
    %cst_17 = arith.constant 2.000000e-01 : f32
    %50 = vector.broadcast %cst_17 : f32 to vector<2x8x8xf32>
    %51 = arith.mulf %50, %47 : vector<2x8x8xf32>
    %52 = arith.select %49, %47, %51 : vector<2x8x8xi1>, vector<2x8x8xf32>
    %cst_18 = arith.constant -9.000000e+15 : f32
    %53 = vector.broadcast %cst_18 : f32 to vector<2x8x8xf32>
    %54 = arith.select %2, %52, %53 : vector<2x8x8xi1>, vector<2x8x8xf32>
    %cst_19 = arith.constant dense<0xFF800000> : vector<2x8xf32>
    %55 = vector.multi_reduction <maximumf>, %54, %cst_19 [2] : vector<2x8x8xf32> to vector<2x8xf32>
    %56 = vector.shape_cast %55 : vector<2x8xf32> to vector<2x8x1xf32>
    %57 = vector.broadcast %56 : vector<2x8x1xf32> to vector<2x8x8xf32>
    %58 = arith.subf %54, %57 : vector<2x8x8xf32>
    %59 = math.exp %58 : vector<2x8x8xf32>
    %cst_20 = arith.constant dense<0.000000e+00> : vector<2x8xf32>
    %60 = vector.multi_reduction <add>, %59, %cst_20 [2] : vector<2x8x8xf32> to vector<2x8xf32>
    %61 = vector.shape_cast %60 : vector<2x8xf32> to vector<2x8x1xf32>
    %62 = tpu.reciprocal %61 {approx = true} : vector<2x8x1xf32> -> vector<2x8x1xf32>
    %63 = vector.broadcast %62 : vector<2x8x1xf32> to vector<2x8x8xf32>
    %64 = arith.mulf %59, %63 : vector<2x8x8xf32>
    %65 = vector.extract_strided_slice %7 {offsets = [0, 32], sizes = [16, 32], strides = [1, 1]} : vector<16x64xf32> to vector<16x32xf32>
    %66 = vector.shape_cast %65 : vector<16x32xf32> to vector<2x8x32xf32>
    "tpu.trace_start"() <{level = 10 : i32, message = "bij,bjd->bid"}> : () -> ()
    %cst_21 = arith.constant dense<0.000000e+00> : vector<2x8x32xf32>
    %67 = tpu.matmul %64, %66, %cst_21 {dimension_numbers = #tpu.dot_dimension_numbers<[2], [1], [1], [2], [0, 0, 0, 1, 1, 2], [0], [0]>} : vector<2x8x8xf32>, vector<2x8x32xf32>, vector<2x8x32xf32> -> vector<2x8x32xf32>
    %cst_22 = arith.constant 0.000000e+00 : f32
    "tpu.trace_stop"() : () -> ()
    %68 = vector.broadcast %cst_22 : f32 to vector<2x8x32xf32>
    %69 = arith.cmpf ogt, %67, %68 : vector<2x8x32xf32>
    %70 = math.exp %67 : vector<2x8x32xf32>
    %cst_23 = arith.constant 1.000000e+00 : f32
    %71 = vector.broadcast %cst_23 : f32 to vector<2x8x32xf32>
    %72 = arith.subf %70, %71 : vector<2x8x32xf32>
    %73 = arith.select %69, %67, %72 : vector<2x8x32xi1>, vector<2x8x32xf32>
    %74 = tpu.concatenate %41, %73 in 2 : vector<2x8x32xf32>, vector<2x8x32xf32> -> vector<2x8x64xf32>
    %75 = vector.shape_cast %74 : vector<2x8x64xf32> to vector<16x64xf32>
    %c0_24 = arith.constant 0 : index
    %c0_25 = arith.constant 0 : index
    %76 = vector.load %arg4[%c0_24, %c0_25] : memref<64x3xf32, #tpu.memory_space<vmem>>, vector<64x3xf32>
    %cst_26 = arith.constant dense<0.000000e+00> : vector<16x3xf32>
    %77 = tpu.matmul %75, %76, %cst_26 {dimension_numbers = #tpu.dot_dimension_numbers<[1], [0], [0], [1], [0, 0, 1, 1], [], []>} : vector<16x64xf32>, vector<64x3xf32>, vector<16x3xf32> -> vector<16x3xf32>
    %78 = vector.extract_strided_slice %77 {offsets = [0, 1], sizes = [16, 1], strides = [1, 1]} : vector<16x3xf32> to vector<16x1xf32>
    %79 = vector.shape_cast %78 : vector<16x1xf32> to vector<2x8x1xf32>
    %80 = vector.extract_strided_slice %77 {offsets = [0, 2], sizes = [16, 1], strides = [1, 1]} : vector<16x3xf32> to vector<16x1xf32>
    %81 = vector.shape_cast %80 : vector<16x1xf32> to vector<2x8x1xf32>
    %82 = tpu.transpose %81, [0, 2, 1] : vector<2x8x1xf32> -> vector<2x1x8xf32>
    %83 = vector.broadcast %79 : vector<2x8x1xf32> to vector<2x8x8xf32>
    %84 = vector.broadcast %82 : vector<2x1x8xf32> to vector<2x8x8xf32>
    %85 = arith.addf %83, %84 : vector<2x8x8xf32>
    %cst_27 = arith.constant 0.000000e+00 : f32
    %86 = vector.broadcast %cst_27 : f32 to vector<2x8x8xf32>
    %87 = arith.cmpf ogt, %85, %86 : vector<2x8x8xf32>
    %cst_28 = arith.constant 2.000000e-01 : f32
    %88 = vector.broadcast %cst_28 : f32 to vector<2x8x8xf32>
    %89 = arith.mulf %88, %85 : vector<2x8x8xf32>
    %90 = arith.select %87, %85, %89 : vector<2x8x8xi1>, vector<2x8x8xf32>
    %cst_29 = arith.constant -9.000000e+15 : f32
    %91 = vector.broadcast %cst_29 : f32 to vector<2x8x8xf32>
    %92 = arith.select %2, %90, %91 : vector<2x8x8xi1>, vector<2x8x8xf32>
    %cst_30 = arith.constant dense<0xFF800000> : vector<2x8xf32>
    %93 = vector.multi_reduction <maximumf>, %92, %cst_30 [2] : vector<2x8x8xf32> to vector<2x8xf32>
    %94 = vector.shape_cast %93 : vector<2x8xf32> to vector<2x8x1xf32>
    %95 = vector.broadcast %94 : vector<2x8x1xf32> to vector<2x8x8xf32>
    %96 = arith.subf %92, %95 : vector<2x8x8xf32>
    %97 = math.exp %96 : vector<2x8x8xf32>
    %cst_31 = arith.constant dense<0.000000e+00> : vector<2x8xf32>
    %98 = vector.multi_reduction <add>, %97, %cst_31 [2] : vector<2x8x8xf32> to vector<2x8xf32>
    %99 = vector.shape_cast %98 : vector<2x8xf32> to vector<2x8x1xf32>
    %100 = tpu.reciprocal %99 {approx = true} : vector<2x8x1xf32> -> vector<2x8x1xf32>
    %101 = vector.extract_strided_slice %77 {offsets = [0, 0], sizes = [16, 1], strides = [1, 1]} : vector<16x3xf32> to vector<16x1xf32>
    %102 = vector.shape_cast %101 : vector<16x1xf32> to vector<2x8x1xf32>
    %103 = tpu.transpose %102, [0, 2, 1] : vector<2x8x1xf32> -> vector<2x1x8xf32>
    %104 = vector.broadcast %103 : vector<2x1x8xf32> to vector<2x8x8xf32>
    %105 = arith.mulf %97, %104 : vector<2x8x8xf32>
    %cst_32 = arith.constant dense<0.000000e+00> : vector<2x8xf32>
    %106 = vector.multi_reduction <add>, %105, %cst_32 [2] : vector<2x8x8xf32> to vector<2x8xf32>
    %107 = vector.shape_cast %106 : vector<2x8xf32> to vector<2x8x1xf32>
    %108 = arith.mulf %107, %100 : vector<2x8x1xf32>
    %109 = tpu.transpose %108, [0, 2, 1] : vector<2x8x1xf32> -> vector<2x1x8xf32>
    %110 = vector.shape_cast %109 : vector<2x1x8xf32> to vector<2x8xf32>
    %c0_33 = arith.constant 0 : index
    %c0_34 = arith.constant 0 : index
    %111 = vector.load %arg5[%c0_33, %c0_34] : memref<2x8xf32, #tpu.memory_space<vmem>>, vector<2x8xf32>
    tpu.vector_store %arg5[%c0_33, %c0_34], %110 {strides = array<i32>} : memref<2x8xf32, #tpu.memory_space<vmem>>, vector<2x8xf32>,
    return
  }
  func.func @transform_0(%arg0: i32) -> (i32, i32, i32) {
    %c0_i32 = arith.constant 0 : i32
    %c0_i32_0 = arith.constant 0 : i32
    %c0_i32_1 = arith.constant 0 : i32
    return %arg0, %c0_i32, %c0_i32_0 : i32, i32, i32
  }
  func.func @transform_1(%arg0: i32) -> (i32, i32, i32) {
    %c0_i32 = arith.constant 0 : i32
    %c0_i32_0 = arith.constant 0 : i32
    %c0_i32_1 = arith.constant 0 : i32
    return %arg0, %c0_i32, %c0_i32_0 : i32, i32, i32
  }
  func.func @transform_2(%arg0: i32) -> (i32, i32) {
    %c0_i32 = arith.constant 0 : i32
    %c0_i32_0 = arith.constant 0 : i32
    %c0_i32_1 = arith.constant 0 : i32
    return %c0_i32, %c0_i32_0 : i32, i32
  }
  func.func @transform_3(%arg0: i32) -> (i32, i32) {
    %c0_i32 = arith.constant 0 : i32
    %c0_i32_0 = arith.constant 0 : i32
    %c0_i32_1 = arith.constant 0 : i32
    return %c0_i32, %c0_i32_0 : i32, i32
  }
  func.func @transform_4(%arg0: i32) -> (i32, i32) {
    %c0_i32 = arith.constant 0 : i32
    %c0_i32_0 = arith.constant 0 : i32
    return %arg0, %c0_i32 : i32, i32
  }
}

</mosaic_0001>

<llo_original>
// kernel: tpu_custom_call.1
$region0: #{tpu_custom_call.1}
  #allocation0 [shape = 'u32[]', space=smem, size = 0x4, offset = 0x4, fixed_abs, tag = 'smem constant byte address 0x4 - core index']
  #allocation1 [shape = 'u32[144,128]{1,0:T(1,128)}', space=vmem, size = 0x12000, scoped, tag = 'internal scratch']
  %s0 = inlined_call_operand.vmem [shape: f32[2,8,16], index: 0, kind: input, shape index: {}]
  %s1 = inlined_call_operand.vmem [shape: f32[2,8,8], index: 1, kind: input, shape index: {}]
  %s2 = inlined_call_operand.vmem [shape: f32[16,68], index: 2, kind: input, shape index: {}]
  %s3 = inlined_call_operand.vmem [shape: f32[64,3], index: 3, kind: input, shape index: {}]
  %s4 = inlined_call_operand.hbm [shape: f32[2,8], index: 4, kind: output, shape index: {}]
  %s5 = sld [smem:[#allocation0]]
  $region26: #{tpu_custom_call.1} parent=0
    _
  %s7 = ssub.s32 1, %s5
  %s8 = scalar_select 0, %s7, %s5
  $region1: #{tpu_custom_call.1} parent=0
    #allocation2 [shape = 'u8[1024]{0}', space=vmem, size = 0x400, scoped, tag = 'output window, operand 0, single buffered']
    #allocation3 [shape = 's32[1]{0}', space=sflag, size = 0x4, scoped, tag = 'scoped memory for tpu_custom_call.1']
    %9 = vsyncpa [#allocation3], 0
    // Predicated region
    $region2: #{tpu_custom_call.1} parent=1 // pred_check
      _
    $region3: #{tpu_custom_call.1} parent=1 // pred_check_branch
      %11 = sbr.rel (0) target = $region5
    $region4: #{tpu_custom_call.1} parent=1 // pred_region
      _
    $region5: #{tpu_custom_call.1} parent=1 // pred_fallthru
      _
    // Predicated region
    $region6: #{tpu_custom_call.1} parent=1 // pred_check
      _
    $region7: #{tpu_custom_call.1} parent=1 // pred_check_branch
      %13 = sbr.rel (0) target = $region9
    $region8: #{tpu_custom_call.1} parent=1 // pred_region
      _
    $region9: #{tpu_custom_call.1} parent=1 // pred_fallthru
      _
    // Predicated region
    $region10: #{tpu_custom_call.1} parent=1 // pred_check
      _
    $region11: #{tpu_custom_call.1} parent=1 // pred_check_branch
      %15 = sbr.rel (0) target = $region13
    $region12: #{tpu_custom_call.1} parent=1 // pred_region
      _
    $region13: #{tpu_custom_call.1} parent=1 // pred_fallthru
      _
    // Predicated region
    $region14: #{tpu_custom_call.1} parent=1 // pred_check
      _
    $region15: #{tpu_custom_call.1} parent=1 // pred_check_branch
      %17 = sbr.rel (0) target = $region17
    $region16: #{tpu_custom_call.1} parent=1 // pred_region
      _
    $region17: #{tpu_custom_call.1} parent=1 // pred_fallthru
      _
    %v18 = vld [vmem:[%s1] sm:$0xff]
    %v19 = vld [vmem:[%s1 + $0x8] sm:$0xff]
    %vm20 = vcmp.gt.f32.partialorder %v18, 0.0
    %vm21 = vcmp.gt.f32.partialorder %v19, 0.0
    %v22 = vld [vmem:[%s0] sm:$0xff]
    %v23 = vld [vmem:[%s0 + $0x8] sm:$0xff]
    %v24 = vld [vmem:[%s2] sm:$0xff]
    %v25 = vld [vmem:[%s2 + $0x8] sm:$0xff]
    %vm26 = vcmask 130048
    %v28 = vsel %vm26, %v22, 0
    %v31 = vsel %vm26, %v23, 0
    %33 = vmatprep.subr.mxu0 0.0
    %34 = vmatpush1.msra.mxu0 %v24
    %35 = vmatprep.subr.mxu0 0.0
    %36 = vmatpush1.msra.mxu0 %v25
    %37 = vmatprep.subr.mxu0 0.0
    %38 = vmatpush1.msra.mxu0 0.0
    %39 = vmatprep.subr.mxu0 0.0
    %40 = vmatpush1.msra.mxu0 0.0
    %41 = vmatprep.subr.mxu0 0.0
    %42 = vmatpush1.msra.mxu0 0.0
    %43 = vmatprep.subr.mxu0 0.0
    %44 = vmatpush1.msra.mxu0 0.0
    %45 = vmatprep.subr.mxu0 0.0
    %46 = vmatpush1.msra.mxu0 0.0
    %47 = vmatprep.subr.mxu0 0.0
    %48 = vmatpush1.msra.mxu0 0.0
    %49 = vmatprep.subr.mxu0 0.0
    %50 = vmatpush1.msra.mxu0 0.0
    %51 = vmatprep.subr.mxu0 0.0
    %52 = vmatpush1.msra.mxu0 0.0
    %53 = vmatprep.subr.mxu0 0.0
    %54 = vmatpush1.msra.mxu0 0.0
    %55 = vmatprep.subr.mxu0 0.0
    %56 = vmatpush1.msra.mxu0 0.0
    %57 = vmatprep.subr.mxu0 0.0
    %58 = vmatpush1.msra.mxu0 0.0
    %59 = vmatprep.subr.mxu0 0.0
    %60 = vmatpush1.msra.mxu0 0.0
    %61 = vmatprep.subr.mxu0 0.0
    %62 = vmatpush1.msra.mxu0 0.0
    %63 = vmatprep.subr.mxu0 0.0
    %64 = vmatpush1.msra.mxu0 0.0
    %65 = vmatprep.subr.mxu0 0.0
    %66 = vmatpush1.msra.mxu0 0.0
    %67 = vmatprep.subr.mxu0 0.0
    %68 = vmatpush1.msra.mxu0 0.0
    %69 = vmatprep.subr.mxu0 0.0
    %70 = vmatpush1.msra.mxu0 0.0
    %71 = vmatprep.subr.mxu0 0.0
    %72 = vmatpush1.msra.mxu0 0.0
    %73 = vmatprep.subr.mxu0 0.0
    %74 = vmatpush1.msra.mxu0 0.0
    %75 = vmatprep.subr.mxu0 0.0
    %76 = vmatpush1.msra.mxu0 0.0
    %77 = vmatprep.subr.mxu0 0.0
    %78 = vmatpush1.msra.mxu0 0.0
    %79 = vmatprep.subr.mxu0 0.0
    %80 = vmatpush1.msra.mxu0 0.0
    %81 = vmatprep.subr.mxu0 0.0
    %82 = vmatpush1.msra.mxu0 0.0
    %83 = vmatprep.subr.mxu0 0.0
    %84 = vmatpush1.msra.mxu0 0.0
    %85 = vmatprep.subr.mxu0 0.0
    %86 = vmatpush1.msra.mxu0 0.0
    %87 = vmatprep.subr.mxu0 0.0
    %88 = vmatpush1.msra.mxu0 0.0
    %89 = vmatprep.subr.mxu0 0.0
    %90 = vmatpush1.msra.mxu0 0.0
    %91 = vmatprep.subr.mxu0 0.0
    %92 = vmatpush1.msra.mxu0 0.0
    %93 = vmatprep.subr.mxu0 0.0
    %94 = vmatpush1.msra.mxu0 0.0
    %95 = vmatprep.subr.mxu0 0.0
    %96 = vmatpush1.msra.mxu0 0.0
    %97 = vmatprep.mubr.f32.mxu0 0.0
    %98 = vmatmul.mubr.f32.gmra.mrb[0].mxu0 %v28
    %v99 = vpop.f32.mrb[0].mxu0
    %v100 = vadd.f32 0.0, %v99
    %v101 = vpop.f32.mrb[0].mxu0
    %102 = vmatprep.mubr.f32.mxu0 0.0
    %103 = vmatmul.mubr.f32.gmra.mrb[0].mxu0 %v31
    %v104 = vpop.f32.mrb[0].mxu0
    %v105 = vadd.f32 0.0, %v104
    %v106 = vpop.f32.mrb[0].mxu0
    %107 = vdwg.mxu0
    %110 = vrot.lane.b32.xlu0 %v100, 62
    %v111 = vpop.permute.xlu0 %110
    %112 = vrot.lane.b32.xlu0 %v105, 62
    %v113 = vpop.permute.xlu0 %112
    %116 = vxpose.xlu0.b32.start [1/16] %v111, 128
    %117 = vxpose.xlu0.b32.cont [2/16] 0.0, 128
    %118 = vxpose.xlu0.b32.cont [3/16] 0.0, 128
    %119 = vxpose.xlu0.b32.cont [4/16] 0.0, 128
    %120 = vxpose.xlu0.b32.cont [5/16] 0.0, 128
    %121 = vxpose.xlu0.b32.cont [6/16] 0.0, 128
    %122 = vxpose.xlu0.b32.cont [7/16] 0.0, 128
    %123 = vxpose.xlu0.b32.cont [8/16] 0.0, 128
    %124 = vxpose.xlu0.b32.cont [9/16] 0.0, 128
    %125 = vxpose.xlu0.b32.cont [10/16] 0.0, 128
    %126 = vxpose.xlu0.b32.cont [11/16] 0.0, 128
    %127 = vxpose.xlu0.b32.cont [12/16] 0.0, 128
    %128 = vxpose.xlu0.b32.cont [13/16] 0.0, 128
    %129 = vxpose.xlu0.b32.cont [14/16] 0.0, 128
    %130 = vxpose.xlu0.b32.cont [15/16] 0.0, 128
    %131 = vxpose.xlu0.b32.end [16/16] 0.0, 128
    %v132 = vpop.trf.xlu0
    %v133 = vpop.trf.xlu0
    %v134 = vpop.trf.xlu0
    %v135 = vpop.trf.xlu0
    %v136 = vpop.trf.xlu0
    %v137 = vpop.trf.xlu0
    %v138 = vpop.trf.xlu0
    %v139 = vpop.trf.xlu0
    %v140 = vpop.trf.xlu0
    %v141 = vpop.trf.xlu0
    %v142 = vpop.trf.xlu0
    %v143 = vpop.trf.xlu0
    %v144 = vpop.trf.xlu0
    %v145 = vpop.trf.xlu0
    %v146 = vpop.trf.xlu0
    %v147 = vpop.trf.xlu0
    %148 = vxpose.xlu0.b32.start [1/16] %v113, 128
    %149 = vxpose.xlu0.b32.cont [2/16] 0.0, 128
    %150 = vxpose.xlu0.b32.cont [3/16] 0.0, 128
    %151 = vxpose.xlu0.b32.cont [4/16] 0.0, 128
    %152 = vxpose.xlu0.b32.cont [5/16] 0.0, 128
    %153 = vxpose.xlu0.b32.cont [6/16] 0.0, 128
    %154 = vxpose.xlu0.b32.cont [7/16] 0.0, 128
    %155 = vxpose.xlu0.b32.cont [8/16] 0.0, 128
    %156 = vxpose.xlu0.b32.cont [9/16] 0.0, 128
    %157 = vxpose.xlu0.b32.cont [10/16] 0.0, 128
    %158 = vxpose.xlu0.b32.cont [11/16] 0.0, 128
    %159 = vxpose.xlu0.b32.cont [12/16] 0.0, 128
    %160 = vxpose.xlu0.b32.cont [13/16] 0.0, 128
    %161 = vxpose.xlu0.b32.cont [14/16] 0.0, 128
    %162 = vxpose.xlu0.b32.cont [15/16] 0.0, 128
    %163 = vxpose.xlu0.b32.end [16/16] 0.0, 128
    %v164 = vpop.trf.xlu0
    %v165 = vpop.trf.xlu0
    %v166 = vpop.trf.xlu0
    %v167 = vpop.trf.xlu0
    %v168 = vpop.trf.xlu0
    %v169 = vpop.trf.xlu0
    %v170 = vpop.trf.xlu0
    %v171 = vpop.trf.xlu0
    %v172 = vpop.trf.xlu0
    %v173 = vpop.trf.xlu0
    %v174 = vpop.trf.xlu0
    %v175 = vpop.trf.xlu0
    %v176 = vpop.trf.xlu0
    %v177 = vpop.trf.xlu0
    %v178 = vpop.trf.xlu0
    %v179 = vpop.trf.xlu0
    %180 = vset.pattern.permute.xlu0 64
    %181 = vperm.xlu0 %180, %v100
    %v182 = vpop.permute.xlu0 %181
    %184 = vset.pattern.permute.xlu0 64
    %185 = vperm.xlu0 %184, %v105
    %v186 = vpop.permute.xlu0 %185
    %v188 = vlaneseq
    %v189 = vshrl.u32 %v188, 7
    %v190 = vsub.s32 0, %v189
    %v191 = vrot.slane %v132, %v190
    %v192 = vlaneseq
    %v193 = vshrl.u32 %v192, 7
    %v194 = vsub.s32 0, %v193
    %v195 = vrot.slane %v164, %v194
    %v196 = vadd.f32 %v182, %v191
    %v197 = vadd.f32 %v186, %v195
    %vm198 = vcmp.gt.f32.partialorder %v196, 0.0
    %vm199 = vcmp.gt.f32.partialorder %v197, 0.0
    %v200 = vmul.f32 %v196, 0.2
    %v201 = vmul.f32 %v197, 0.2
    %v202 = vsel %vm198, %v196, %v200
    %v203 = vsel %vm199, %v197, %v201
    %v204 = vsel %vm20, %v202, -9e+15
    %v205 = vsel %vm21, %v203, -9e+15
    %vm206 = vcmask 64512
    %v207 = vsel %vm206, %v204, -inf
    %208 = vmax.xlane.f32.xlu0 %v207
    %v209 = vpop.xlane.xlu0 %208
    %v210 = vsel %vm206, %v205, -inf
    %211 = vmax.xlane.f32.xlu0 %v210
    %v212 = vpop.xlane.xlu0 %211
    %v213 = vsub.f32 %v204, %v209
    %v214 = vsub.f32 %v205, %v212
    %v215 = vmul.f32 %v213, 1.442695
    %v216 = vpow.pop %v215
    %v217 = vmul.f32 %v214, 1.442695
    %v218 = vpow.pop %v217
    %v219 = vsel %vm206, %v216, 0.0
    %220 = vadd.xlane.f32.xlu0 %v219
    %v221 = vpop.xlane.xlu0 %220
    %v222 = vsel %vm206, %v218, 0.0
    %223 = vadd.xlane.f32.xlu0 %v222
    %v224 = vpop.xlane.xlu0 %223
    %v225 = vrcp.pop %v221
    %v226 = vrcp.pop %v224
    %v227 = vmul.f32 %v216, %v225
    %v228 = vmul.f32 %v218, %v226
    %v230 = vsel %vm206, %v227, 0
    %232 = vmatprep.subr.mxu0 0.0
    %233 = vmatpush1.msra.mxu0 %v100
    %234 = vmatprep.subr.mxu0 0.0
    %235 = vmatpush1.msra.mxu0 0.0
    %236 = vmatprep.subr.mxu0 0.0
    %237 = vmatpush1.msra.mxu0 0.0
    %238 = vmatprep.subr.mxu0 0.0
    %239 = vmatpush1.msra.mxu0 0.0
    %240 = vmatprep.subr.mxu0 0.0
    %241 = vmatpush1.msra.mxu0 0.0
    %242 = vmatprep.subr.mxu0 0.0
    %243 = vmatpush1.msra.mxu0 0.0
    %244 = vmatprep.subr.mxu0 0.0
    %245 = vmatpush1.msra.mxu0 0.0
    %246 = vmatprep.subr.mxu0 0.0
    %247 = vmatpush1.msra.mxu0 0.0
    %248 = vmatprep.subr.mxu0 0.0
    %249 = vmatpush1.msra.mxu0 0.0
    %250 = vmatprep.subr.mxu0 0.0
    %251 = vmatpush1.msra.mxu0 0.0
    %252 = vmatprep.subr.mxu0 0.0
    %253 = vmatpush1.msra.mxu0 0.0
    %254 = vmatprep.subr.mxu0 0.0
    %255 = vmatpush1.msra.mxu0 0.0
    %256 = vmatprep.subr.mxu0 0.0
    %257 = vmatpush1.msra.mxu0 0.0
    %258 = vmatprep.subr.mxu0 0.0
    %259 = vmatpush1.msra.mxu0 0.0
    %260 = vmatprep.subr.mxu0 0.0
    %261 = vmatpush1.msra.mxu0 0.0
    %262 = vmatprep.subr.mxu0 0.0
    %263 = vmatpush1.msra.mxu0 0.0
    %264 = vmatprep.subr.mxu0 0.0
    %265 = vmatpush1.msra.mxu0 0.0
    %266 = vmatprep.subr.mxu0 0.0
    %267 = vmatpush1.msra.mxu0 0.0
    %268 = vmatprep.subr.mxu0 0.0
    %269 = vmatpush1.msra.mxu0 0.0
    %270 = vmatprep.subr.mxu0 0.0
    %271 = vmatpush1.msra.mxu0 0.0
    %272 = vmatprep.subr.mxu0 0.0
    %273 = vmatpush1.msra.mxu0 0.0
    %274 = vmatprep.subr.mxu0 0.0
    %275 = vmatpush1.msra.mxu0 0.0
    %276 = vmatprep.subr.mxu0 0.0
    %277 = vmatpush1.msra.mxu0 0.0
    %278 = vmatprep.subr.mxu0 0.0
    %279 = vmatpush1.msra.mxu0 0.0
    %280 = vmatprep.subr.mxu0 0.0
    %281 = vmatpush1.msra.mxu0 0.0
    %282 = vmatprep.subr.mxu0 0.0
    %283 = vmatpush1.msra.mxu0 0.0
    %284 = vmatprep.subr.mxu0 0.0
    %285 = vmatpush1.msra.mxu0 0.0
    %286 = vmatprep.subr.mxu0 0.0
    %287 = vmatpush1.msra.mxu0 0.0
    %288 = vmatprep.subr.mxu0 0.0
    %289 = vmatpush1.msra.mxu0 0.0
    %290 = vmatprep.subr.mxu0 0.0
    %291 = vmatpush1.msra.mxu0 0.0
    %292 = vmatprep.subr.mxu0 0.0
    %293 = vmatpush1.msra.mxu0 0.0
    %294 = vmatprep.subr.mxu0 0.0
    %295 = vmatpush1.msra.mxu0 0.0
    %296 = vmatprep.mubr.f32.mxu0 0.0
    %297 = vmatmul.mubr.f32.gmra.mrb[0].mxu0 %v230
    %v298 = vpop.f32.mrb[0].mxu0
    %v299 = vadd.f32 0.0, %v298
    %v300 = vpop.f32.mrb[0].mxu0
    %301 = vdwg.mxu0
    %v303 = vsel %vm206, %v228, 0
    %305 = vmatprep.subr.mxu0 0.0
    %306 = vmatpush1.msra.mxu0 %v105
    %307 = vmatprep.subr.mxu0 0.0
    %308 = vmatpush1.msra.mxu0 0.0
    %309 = vmatprep.subr.mxu0 0.0
    %310 = vmatpush1.msra.mxu0 0.0
    %311 = vmatprep.subr.mxu0 0.0
    %312 = vmatpush1.msra.mxu0 0.0
    %313 = vmatprep.subr.mxu0 0.0
    %314 = vmatpush1.msra.mxu0 0.0
    %315 = vmatprep.subr.mxu0 0.0
    %316 = vmatpush1.msra.mxu0 0.0
    %317 = vmatprep.subr.mxu0 0.0
    %318 = vmatpush1.msra.mxu0 0.0
    %319 = vmatprep.subr.mxu0 0.0
    %320 = vmatpush1.msra.mxu0 0.0
    %321 = vmatprep.subr.mxu0 0.0
    %322 = vmatpush1.msra.mxu0 0.0
    %323 = vmatprep.subr.mxu0 0.0
    %324 = vmatpush1.msra.mxu0 0.0
    %325 = vmatprep.subr.mxu0 0.0
    %326 = vmatpush1.msra.mxu0 0.0
    %327 = vmatprep.subr.mxu0 0.0
    %328 = vmatpush1.msra.mxu0 0.0
    %329 = vmatprep.subr.mxu0 0.0
    %330 = vmatpush1.msra.mxu0 0.0
    %331 = vmatprep.subr.mxu0 0.0
    %332 = vmatpush1.msra.mxu0 0.0
    %333 = vmatprep.subr.mxu0 0.0
    %334 = vmatpush1.msra.mxu0 0.0
    %335 = vmatprep.subr.mxu0 0.0
    %336 = vmatpush1.msra.mxu0 0.0
    %337 = vmatprep.subr.mxu0 0.0
    %338 = vmatpush1.msra.mxu0 0.0
    %339 = vmatprep.subr.mxu0 0.0
    %340 = vmatpush1.msra.mxu0 0.0
    %341 = vmatprep.subr.mxu0 0.0
    %342 = vmatpush1.msra.mxu0 0.0
    %343 = vmatprep.subr.mxu0 0.0
    %344 = vmatpush1.msra.mxu0 0.0
    %345 = vmatprep.subr.mxu0 0.0
    %346 = vmatpush1.msra.mxu0 0.0
    %347 = vmatprep.subr.mxu0 0.0
    %348 = vmatpush1.msra.mxu0 0.0
    %349 = vmatprep.subr.mxu0 0.0
    %350 = vmatpush1.msra.mxu0 0.0
    %351 = vmatprep.subr.mxu0 0.0
    %352 = vmatpush1.msra.mxu0 0.0
    %353 = vmatprep.subr.mxu0 0.0
    %354 = vmatpush1.msra.mxu0 0.0
    %355 = vmatprep.subr.mxu0 0.0
    %356 = vmatpush1.msra.mxu0 0.0
    %357 = vmatprep.subr.mxu0 0.0
    %358 = vmatpush1.msra.mxu0 0.0
    %359 = vmatprep.subr.mxu0 0.0
    %360 = vmatpush1.msra.mxu0 0.0
    %361 = vmatprep.subr.mxu0 0.0
    %362 = vmatpush1.msra.mxu0 0.0
    %363 = vmatprep.subr.mxu0 0.0
    %364 = vmatpush1.msra.mxu0 0.0
    %365 = vmatprep.subr.mxu0 0.0
    %366 = vmatpush1.msra.mxu0 0.0
    %367 = vmatprep.subr.mxu0 0.0
    %368 = vmatpush1.msra.mxu0 0.0
    %369 = vmatprep.mubr.f32.mxu0 0.0
    %370 = vmatmul.mubr.f32.gmra.mrb[0].mxu0 %v303
    %v371 = vpop.f32.mrb[0].mxu0
    %v372 = vadd.f32 0.0, %v371
    %v373 = vpop.f32.mrb[0].mxu0
    %374 = vdwg.mxu0
    %vm375 = vcmp.gt.f32.partialorder %v299, 0.0
    %vm376 = vcmp.gt.f32.partialorder %v372, 0.0
    %v377 = vmul.f32 %v299, 1.442695
    %v378 = vpow.pop %v377
    %v379 = vmul.f32 %v372, 1.442695
    %v380 = vpow.pop %v379
    %v381 = vsub.f32 %v378, 1.0
    %v382 = vsub.f32 %v380, 1.0
    %v383 = vsel %vm375, %v299, %v381
    %v384 = vsel %vm376, %v372, %v382
    %385 = vrot.lane.b32.xlu0 %v100, 61
    %v386 = vpop.permute.xlu0 %385
    %387 = vrot.lane.b32.xlu0 %v105, 61
    %v388 = vpop.permute.xlu0 %387
    %391 = vxpose.xlu0.b32.start [1/16] %v386, 128
    %392 = vxpose.xlu0.b32.cont [2/16] 0.0, 128
    %393 = vxpose.xlu0.b32.cont [3/16] 0.0, 128
    %394 = vxpose.xlu0.b32.cont [4/16] 0.0, 128
    %395 = vxpose.xlu0.b32.cont [5/16] 0.0, 128
    %396 = vxpose.xlu0.b32.cont [6/16] 0.0, 128
    %397 = vxpose.xlu0.b32.cont [7/16] 0.0, 128
    %398 = vxpose.xlu0.b32.cont [8/16] 0.0, 128
    %399 = vxpose.xlu0.b32.cont [9/16] 0.0, 128
    %400 = vxpose.xlu0.b32.cont [10/16] 0.0, 128
    %401 = vxpose.xlu0.b32.cont [11/16] 0.0, 128
    %402 = vxpose.xlu0.b32.cont [12/16] 0.0, 128
    %403 = vxpose.xlu0.b32.cont [13/16] 0.0, 128
    %404 = vxpose.xlu0.b32.cont [14/16] 0.0, 128
    %405 = vxpose.xlu0.b32.cont [15/16] 0.0, 128
    %406 = vxpose.xlu0.b32.end [16/16] 0.0, 128
    %v407 = vpop.trf.xlu0
    %v408 = vpop.trf.xlu0
    %v409 = vpop.trf.xlu0
    %v410 = vpop.trf.xlu0
    %v411 = vpop.trf.xlu0
    %v412 = vpop.trf.xlu0
    %v413 = vpop.trf.xlu0
    %v414 = vpop.trf.xlu0
    %v415 = vpop.trf.xlu0
    %v416 = vpop.trf.xlu0
    %v417 = vpop.trf.xlu0
    %v418 = vpop.trf.xlu0
    %v419 = vpop.trf.xlu0
    %v420 = vpop.trf.xlu0
    %v421 = vpop.trf.xlu0
    %v422 = vpop.trf.xlu0
    %423 = vxpose.xlu0.b32.start [1/16] %v388, 128
    %424 = vxpose.xlu0.b32.cont [2/16] 0.0, 128
    %425 = vxpose.xlu0.b32.cont [3/16] 0.0, 128
    %426 = vxpose.xlu0.b32.cont [4/16] 0.0, 128
    %427 = vxpose.xlu0.b32.cont [5/16] 0.0, 128
    %428 = vxpose.xlu0.b32.cont [6/16] 0.0, 128
    %429 = vxpose.xlu0.b32.cont [7/16] 0.0, 128
    %430 = vxpose.xlu0.b32.cont [8/16] 0.0, 128
    %431 = vxpose.xlu0.b32.cont [9/16] 0.0, 128
    %432 = vxpose.xlu0.b32.cont [10/16] 0.0, 128
    %433 = vxpose.xlu0.b32.cont [11/16] 0.0, 128
    %434 = vxpose.xlu0.b32.cont [12/16] 0.0, 128
    %435 = vxpose.xlu0.b32.cont [13/16] 0.0, 128
    %436 = vxpose.xlu0.b32.cont [14/16] 0.0, 128
    %437 = vxpose.xlu0.b32.cont [15/16] 0.0, 128
    %438 = vxpose.xlu0.b32.end [16/16] 0.0, 128
    %v439 = vpop.trf.xlu0
    %v440 = vpop.trf.xlu0
    %v441 = vpop.trf.xlu0
    %v442 = vpop.trf.xlu0
    %v443 = vpop.trf.xlu0
    %v444 = vpop.trf.xlu0
    %v445 = vpop.trf.xlu0
    %v446 = vpop.trf.xlu0
    %v447 = vpop.trf.xlu0
    %v448 = vpop.trf.xlu0
    %v449 = vpop.trf.xlu0
    %v450 = vpop.trf.xlu0
    %v451 = vpop.trf.xlu0
    %v452 = vpop.trf.xlu0
    %v453 = vpop.trf.xlu0
    %v454 = vpop.trf.xlu0
    %455 = vset.pattern.permute.xlu0 65
    %456 = vperm.xlu0 %455, %v100
    %v457 = vpop.permute.xlu0 %456
    %459 = vset.pattern.permute.xlu0 65
    %460 = vperm.xlu0 %459, %v105
    %v461 = vpop.permute.xlu0 %460
    %v463 = vlaneseq
    %v464 = vshrl.u32 %v463, 7
    %v465 = vsub.s32 0, %v464
    %v466 = vrot.slane %v407, %v465
    %v467 = vlaneseq
    %v468 = vshrl.u32 %v467, 7
    %v469 = vsub.s32 0, %v468
    %v470 = vrot.slane %v439, %v469
    %v471 = vadd.f32 %v457, %v466
    %v472 = vadd.f32 %v461, %v470
    %vm473 = vcmp.gt.f32.partialorder %v471, 0.0
    %vm474 = vcmp.gt.f32.partialorder %v472, 0.0
    %v475 = vmul.f32 %v471, 0.2
    %v476 = vmul.f32 %v472, 0.2
    %v477 = vsel %vm473, %v471, %v475
    %v478 = vsel %vm474, %v472, %v476
    %v479 = vsel %vm20, %v477, -9e+15
    %v480 = vsel %vm21, %v478, -9e+15
    %v481 = vsel %vm206, %v479, -inf
    %482 = vmax.xlane.f32.xlu0 %v481
    %v483 = vpop.xlane.xlu0 %482
    %v484 = vsel %vm206, %v480, -inf
    %485 = vmax.xlane.f32.xlu0 %v484
    %v486 = vpop.xlane.xlu0 %485
    %v487 = vsub.f32 %v479, %v483
    %v488 = vsub.f32 %v480, %v486
    %v489 = vmul.f32 %v487, 1.442695
    %v490 = vpow.pop %v489
    %v491 = vmul.f32 %v488, 1.442695
    %v492 = vpow.pop %v491
    %v493 = vsel %vm206, %v490, 0.0
    %494 = vadd.xlane.f32.xlu0 %v493
    %v495 = vpop.xlane.xlu0 %494
    %v496 = vsel %vm206, %v492, 0.0
    %497 = vadd.xlane.f32.xlu0 %v496
    %v498 = vpop.xlane.xlu0 %497
    %v499 = vrcp.pop %v495
    %v500 = vrcp.pop %v498
    %v501 = vmul.f32 %v490, %v499
    %v502 = vmul.f32 %v492, %v500
    %503 = vrot.lane.b32.xlu0 %v100, 96
    %v504 = vpop.permute.xlu0 %503
    %v507 = vsel %vm206, %v501, 0
    %509 = vmatprep.subr.mxu0 0.0
    %510 = vmatpush1.msra.mxu0 %v504
    %511 = vmatprep.subr.mxu0 0.0
    %512 = vmatpush1.msra.mxu0 0.0
    %513 = vmatprep.subr.mxu0 0.0
    %514 = vmatpush1.msra.mxu0 0.0
    %515 = vmatprep.subr.mxu0 0.0
    %516 = vmatpush1.msra.mxu0 0.0
    %517 = vmatprep.subr.mxu0 0.0
    %518 = vmatpush1.msra.mxu0 0.0
    %519 = vmatprep.subr.mxu0 0.0
    %520 = vmatpush1.msra.mxu0 0.0
    %521 = vmatprep.subr.mxu0 0.0
    %522 = vmatpush1.msra.mxu0 0.0
    %523 = vmatprep.subr.mxu0 0.0
    %524 = vmatpush1.msra.mxu0 0.0
    %525 = vmatprep.subr.mxu0 0.0
    %526 = vmatpush1.msra.mxu0 0.0
    %527 = vmatprep.subr.mxu0 0.0
    %528 = vmatpush1.msra.mxu0 0.0
    %529 = vmatprep.subr.mxu0 0.0
    %530 = vmatpush1.msra.mxu0 0.0
    %531 = vmatprep.subr.mxu0 0.0
    %532 = vmatpush1.msra.mxu0 0.0
    %533 = vmatprep.subr.mxu0 0.0
    %534 = vmatpush1.msra.mxu0 0.0
    %535 = vmatprep.subr.mxu0 0.0
    %536 = vmatpush1.msra.mxu0 0.0
    %537 = vmatprep.subr.mxu0 0.0
    %538 = vmatpush1.msra.mxu0 0.0
    %539 = vmatprep.subr.mxu0 0.0
    %540 = vmatpush1.msra.mxu0 0.0
    %541 = vmatprep.subr.mxu0 0.0
    %542 = vmatpush1.msra.mxu0 0.0
    %543 = vmatprep.subr.mxu0 0.0
    %544 = vmatpush1.msra.mxu0 0.0
    %545 = vmatprep.subr.mxu0 0.0
    %546 = vmatpush1.msra.mxu0 0.0
    %547 = vmatprep.subr.mxu0 0.0
    %548 = vmatpush1.msra.mxu0 0.0
    %549 = vmatprep.subr.mxu0 0.0
    %550 = vmatpush1.msra.mxu0 0.0
    %551 = vmatprep.subr.mxu0 0.0
    %552 = vmatpush1.msra.mxu0 0.0
    %553 = vmatprep.subr.mxu0 0.0
    %554 = vmatpush1.msra.mxu0 0.0
    %555 = vmatprep.subr.mxu0 0.0
    %556 = vmatpush1.msra.mxu0 0.0
    %557 = vmatprep.subr.mxu0 0.0
    %558 = vmatpush1.msra.mxu0 0.0
    %559 = vmatprep.subr.mxu0 0.0
    %560 = vmatpush1.msra.mxu0 0.0
    %561 = vmatprep.subr.mxu0 0.0
    %562 = vmatpush1.msra.mxu0 0.0
    %563 = vmatprep.subr.mxu0 0.0
    %564 = vmatpush1.msra.mxu0 0.0
    %565 = vmatprep.subr.mxu0 0.0
    %566 = vmatpush1.msra.mxu0 0.0
    %567 = vmatprep.subr.mxu0 0.0
    %568 = vmatpush1.msra.mxu0 0.0
    %569 = vmatprep.subr.mxu0 0.0
    %570 = vmatpush1.msra.mxu0 0.0
    %571 = vmatprep.subr.mxu0 0.0
    %572 = vmatpush1.msra.mxu0 0.0
    %573 = vmatprep.mubr.f32.mxu0 0.0
    %574 = vmatmul.mubr.f32.gmra.mrb[0].mxu0 %v507
    %v575 = vpop.f32.mrb[0].mxu0
    %v576 = vadd.f32 0.0, %v575
    %v577 = vpop.f32.mrb[0].mxu0
    %578 = vdwg.mxu0
    %579 = vrot.lane.b32.xlu0 %v105, 96
    %v580 = vpop.permute.xlu0 %579
    %v583 = vsel %vm206, %v502, 0
    %585 = vmatprep.subr.mxu0 0.0
    %586 = vmatpush1.msra.mxu0 %v580
    %587 = vmatprep.subr.mxu0 0.0
    %588 = vmatpush1.msra.mxu0 0.0
    %589 = vmatprep.subr.mxu0 0.0
    %590 = vmatpush1.msra.mxu0 0.0
    %591 = vmatprep.subr.mxu0 0.0
    %592 = vmatpush1.msra.mxu0 0.0
    %593 = vmatprep.subr.mxu0 0.0
    %594 = vmatpush1.msra.mxu0 0.0
    %595 = vmatprep.subr.mxu0 0.0
    %596 = vmatpush1.msra.mxu0 0.0
    %597 = vmatprep.subr.mxu0 0.0
    %598 = vmatpush1.msra.mxu0 0.0
    %599 = vmatprep.subr.mxu0 0.0
    %600 = vmatpush1.msra.mxu0 0.0
    %601 = vmatprep.subr.mxu0 0.0
    %602 = vmatpush1.msra.mxu0 0.0
    %603 = vmatprep.subr.mxu0 0.0
    %604 = vmatpush1.msra.mxu0 0.0
    %605 = vmatprep.subr.mxu0 0.0
    %606 = vmatpush1.msra.mxu0 0.0
    %607 = vmatprep.subr.mxu0 0.0
    %608 = vmatpush1.msra.mxu0 0.0
    %609 = vmatprep.subr.mxu0 0.0
    %610 = vmatpush1.msra.mxu0 0.0
    %611 = vmatprep.subr.mxu0 0.0
    %612 = vmatpush1.msra.mxu0 0.0
    %613 = vmatprep.subr.mxu0 0.0
    %614 = vmatpush1.msra.mxu0 0.0
    %615 = vmatprep.subr.mxu0 0.0
    %616 = vmatpush1.msra.mxu0 0.0
    %617 = vmatprep.subr.mxu0 0.0
    %618 = vmatpush1.msra.mxu0 0.0
    %619 = vmatprep.subr.mxu0 0.0
    %620 = vmatpush1.msra.mxu0 0.0
    %621 = vmatprep.subr.mxu0 0.0
    %622 = vmatpush1.msra.mxu0 0.0
    %623 = vmatprep.subr.mxu0 0.0
    %624 = vmatpush1.msra.mxu0 0.0
    %625 = vmatprep.subr.mxu0 0.0
    %626 = vmatpush1.msra.mxu0 0.0
    %627 = vmatprep.subr.mxu0 0.0
    %628 = vmatpush1.msra.mxu0 0.0
    %629 = vmatprep.subr.mxu0 0.0
    %630 = vmatpush1.msra.mxu0 0.0
    %631 = vmatprep.subr.mxu0 0.0
    %632 = vmatpush1.msra.mxu0 0.0
    %633 = vmatprep.subr.mxu0 0.0
    %634 = vmatpush1.msra.mxu0 0.0
    %635 = vmatprep.subr.mxu0 0.0
    %636 = vmatpush1.msra.mxu0 0.0
    %637 = vmatprep.subr.mxu0 0.0
    %638 = vmatpush1.msra.mxu0 0.0
    %639 = vmatprep.subr.mxu0 0.0
    %640 = vmatpush1.msra.mxu0 0.0
    %641 = vmatprep.subr.mxu0 0.0
    %642 = vmatpush1.msra.mxu0 0.0
    %643 = vmatprep.subr.mxu0 0.0
    %644 = vmatpush1.msra.mxu0 0.0
    %645 = vmatprep.subr.mxu0 0.0
    %646 = vmatpush1.msra.mxu0 0.0
    %647 = vmatprep.subr.mxu0 0.0
    %648 = vmatpush1.msra.mxu0 0.0
    %649 = vmatprep.mubr.f32.mxu0 0.0
    %650 = vmatmul.mubr.f32.gmra.mrb[0].mxu0 %v583
    %v651 = vpop.f32.mrb[0].mxu0
    %v652 = vadd.f32 0.0, %v651
    %v653 = vpop.f32.mrb[0].mxu0
    %654 = vdwg.mxu0
    %vm655 = vcmp.gt.f32.partialorder %v576, 0.0
    %vm656 = vcmp.gt.f32.partialorder %v652, 0.0
    %v657 = vmul.f32 %v576, 1.442695
    %v658 = vpow.pop %v657
    %v659 = vmul.f32 %v652, 1.442695
    %v660 = vpow.pop %v659
    %v661 = vsub.f32 %v658, 1.0
    %v662 = vsub.f32 %v660, 1.0
    %v663 = vsel %vm655, %v576, %v661
    %v664 = vsel %vm656, %v652, %v662
    %667 = vrot.lane.b32.xlu0 %v663, 32
    %v668 = vpop.permute.xlu0 %667
    %669 = vrot.lane.b32.xlu0 %v664, 32
    %v670 = vpop.permute.xlu0 %669
    %vm673 = vcmask 261120
    %v674 = vsel %vm673, %v383, %v668
    %v675 = vsel %vm673, %v384, %v670
    %v676 = vld [vmem:[%s3] sm:$0xff]
    %v677 = vld [vmem:[%s3 + $0x8] sm:$0xff]
    %v678 = vld [vmem:[%s3 + $0x10] sm:$0xff]
    %v679 = vld [vmem:[%s3 + $0x18] sm:$0xff]
    %v680 = vld [vmem:[%s3 + $0x20] sm:$0xff]
    %v681 = vld [vmem:[%s3 + $0x28] sm:$0xff]
    %v682 = vld [vmem:[%s3 + $0x30] sm:$0xff]
    %v683 = vld [vmem:[%s3 + $0x38] sm:$0xff]
    %vm684 = vcmask 523264
    %v686 = vsel %vm684, %v674, 0
    %v689 = vsel %vm684, %v675, 0
    %691 = vmatprep.subr.mxu0 0.0
    %692 = vmatpush1.msra.mxu0 %v676
    %693 = vmatprep.subr.mxu0 0.0
    %694 = vmatpush1.msra.mxu0 %v677
    %695 = vmatprep.subr.mxu0 0.0
    %696 = vmatpush1.msra.mxu0 %v678
    %697 = vmatprep.subr.mxu0 0.0
    %698 = vmatpush1.msra.mxu0 %v679
    %699 = vmatprep.subr.mxu0 0.0
    %700 = vmatpush1.msra.mxu0 %v680
    %701 = vmatprep.subr.mxu0 0.0
    %702 = vmatpush1.msra.mxu0 %v681
    %703 = vmatprep.subr.mxu0 0.0
    %704 = vmatpush1.msra.mxu0 %v682
    %705 = vmatprep.subr.mxu0 0.0
    %706 = vmatpush1.msra.mxu0 %v683
    %707 = vmatprep.subr.mxu0 0.0
    %708 = vmatpush1.msra.mxu0 0.0
    %709 = vmatprep.subr.mxu0 0.0
    %710 = vmatpush1.msra.mxu0 0.0
    %711 = vmatprep.subr.mxu0 0.0
    %712 = vmatpush1.msra.mxu0 0.0
    %713 = vmatprep.subr.mxu0 0.0
    %714 = vmatpush1.msra.mxu0 0.0
    %715 = vmatprep.subr.mxu0 0.0
    %716 = vmatpush1.msra.mxu0 0.0
    %717 = vmatprep.subr.mxu0 0.0
    %718 = vmatpush1.msra.mxu0 0.0
    %719 = vmatprep.subr.mxu0 0.0
    %720 = vmatpush1.msra.mxu0 0.0
    %721 = vmatprep.subr.mxu0 0.0
    %722 = vmatpush1.msra.mxu0 0.0
    %723 = vmatprep.subr.mxu0 0.0
    %724 = vmatpush1.msra.mxu0 0.0
    %725 = vmatprep.subr.mxu0 0.0
    %726 = vmatpush1.msra.mxu0 0.0
    %727 = vmatprep.subr.mxu0 0.0
    %728 = vmatpush1.msra.mxu0 0.0
    %729 = vmatprep.subr.mxu0 0.0
    %730 = vmatpush1.msra.mxu0 0.0
    %731 = vmatprep.subr.mxu0 0.0
    %732 = vmatpush1.msra.mxu0 0.0
    %733 = vmatprep.subr.mxu0 0.0
    %734 = vmatpush1.msra.mxu0 0.0
    %735 = vmatprep.subr.mxu0 0.0
    %736 = vmatpush1.msra.mxu0 0.0
    %737 = vmatprep.subr.mxu0 0.0
    %738 = vmatpush1.msra.mxu0 0.0
    %739 = vmatprep.subr.mxu0 0.0
    %740 = vmatpush1.msra.mxu0 0.0
    %741 = vmatprep.subr.mxu0 0.0
    %742 = vmatpush1.msra.mxu0 0.0
    %743 = vmatprep.subr.mxu0 0.0
    %744 = vmatpush1.msra.mxu0 0.0
    %745 = vmatprep.subr.mxu0 0.0
    %746 = vmatpush1.msra.mxu0 0.0
    %747 = vmatprep.subr.mxu0 0.0
    %748 = vmatpush1.msra.mxu0 0.0
    %749 = vmatprep.subr.mxu0 0.0
    %750 = vmatpush1.msra.mxu0 0.0
    %751 = vmatprep.subr.mxu0 0.0
    %752 = vmatpush1.msra.mxu0 0.0
    %753 = vmatprep.subr.mxu0 0.0
    %754 = vmatpush1.msra.mxu0 0.0
    %755 = vmatprep.mubr.f32.mxu0 0.0
    %756 = vmatmul.mubr.f32.gmra.mrb[0].mxu0 %v686
    %v757 = vpop.f32.mrb[0].mxu0
    %v758 = vadd.f32 0.0, %v757
    %v759 = vpop.f32.mrb[0].mxu0
    %760 = vmatprep.mubr.f32.mxu0 0.0
    %761 = vmatmul.mubr.f32.gmra.mrb[0].mxu0 %v689
    %v762 = vpop.f32.mrb[0].mxu0
    %v763 = vadd.f32 0.0, %v762
    %v764 = vpop.f32.mrb[0].mxu0
    %765 = vdwg.mxu0
    %768 = vrot.lane.b32.xlu0 %v758, 126
    %v769 = vpop.permute.xlu0 %768
    %770 = vrot.lane.b32.xlu0 %v763, 126
    %v771 = vpop.permute.xlu0 %770
    %774 = vxpose.xlu0.b32.start [1/16] %v769, 128
    %775 = vxpose.xlu0.b32.cont [2/16] 0.0, 128
    %776 = vxpose.xlu0.b32.cont [3/16] 0.0, 128
    %777 = vxpose.xlu0.b32.cont [4/16] 0.0, 128
    %778 = vxpose.xlu0.b32.cont [5/16] 0.0, 128
    %779 = vxpose.xlu0.b32.cont [6/16] 0.0, 128
    %780 = vxpose.xlu0.b32.cont [7/16] 0.0, 128
    %781 = vxpose.xlu0.b32.cont [8/16] 0.0, 128
    %782 = vxpose.xlu0.b32.cont [9/16] 0.0, 128
    %783 = vxpose.xlu0.b32.cont [10/16] 0.0, 128
    %784 = vxpose.xlu0.b32.cont [11/16] 0.0, 128
    %785 = vxpose.xlu0.b32.cont [12/16] 0.0, 128
    %786 = vxpose.xlu0.b32.cont [13/16] 0.0, 128
    %787 = vxpose.xlu0.b32.cont [14/16] 0.0, 128
    %788 = vxpose.xlu0.b32.cont [15/16] 0.0, 128
    %789 = vxpose.xlu0.b32.end [16/16] 0.0, 128
    %v790 = vpop.trf.xlu0
    %v791 = vpop.trf.xlu0
    %v792 = vpop.trf.xlu0
    %v793 = vpop.trf.xlu0
    %v794 = vpop.trf.xlu0
    %v795 = vpop.trf.xlu0
    %v796 = vpop.trf.xlu0
    %v797 = vpop.trf.xlu0
    %v798 = vpop.trf.xlu0
    %v799 = vpop.trf.xlu0
    %v800 = vpop.trf.xlu0
    %v801 = vpop.trf.xlu0
    %v802 = vpop.trf.xlu0
    %v803 = vpop.trf.xlu0
    %v804 = vpop.trf.xlu0
    %v805 = vpop.trf.xlu0
    %806 = vxpose.xlu0.b32.start [1/16] %v771, 128
    %807 = vxpose.xlu0.b32.cont [2/16] 0.0, 128
    %808 = vxpose.xlu0.b32.cont [3/16] 0.0, 128
    %809 = vxpose.xlu0.b32.cont [4/16] 0.0, 128
    %810 = vxpose.xlu0.b32.cont [5/16] 0.0, 128
    %811 = vxpose.xlu0.b32.cont [6/16] 0.0, 128
    %812 = vxpose.xlu0.b32.cont [7/16] 0.0, 128
    %813 = vxpose.xlu0.b32.cont [8/16] 0.0, 128
    %814 = vxpose.xlu0.b32.cont [9/16] 0.0, 128
    %815 = vxpose.xlu0.b32.cont [10/16] 0.0, 128
    %816 = vxpose.xlu0.b32.cont [11/16] 0.0, 128
    %817 = vxpose.xlu0.b32.cont [12/16] 0.0, 128
    %818 = vxpose.xlu0.b32.cont [13/16] 0.0, 128
    %819 = vxpose.xlu0.b32.cont [14/16] 0.0, 128
    %820 = vxpose.xlu0.b32.cont [15/16] 0.0, 128
    %821 = vxpose.xlu0.b32.end [16/16] 0.0, 128
    %v822 = vpop.trf.xlu0
    %v823 = vpop.trf.xlu0
    %v824 = vpop.trf.xlu0
    %v825 = vpop.trf.xlu0
    %v826 = vpop.trf.xlu0
    %v827 = vpop.trf.xlu0
    %v828 = vpop.trf.xlu0
    %v829 = vpop.trf.xlu0
    %v830 = vpop.trf.xlu0
    %v831 = vpop.trf.xlu0
    %v832 = vpop.trf.xlu0
    %v833 = vpop.trf.xlu0
    %v834 = vpop.trf.xlu0
    %v835 = vpop.trf.xlu0
    %v836 = vpop.trf.xlu0
    %v837 = vpop.trf.xlu0
    %838 = vset.pattern.permute.xlu0 1
    %839 = vperm.xlu0 %838, %v758
    %v840 = vpop.permute.xlu0 %839
    %842 = vset.pattern.permute.xlu0 1
    %843 = vperm.xlu0 %842, %v763
    %v844 = vpop.permute.xlu0 %843
    %v846 = vlaneseq
    %v847 = vshrl.u32 %v846, 7
    %v848 = vsub.s32 0, %v847
    %v849 = vrot.slane %v790, %v848
    %v850 = vlaneseq
    %v851 = vshrl.u32 %v850, 7
    %v852 = vsub.s32 0, %v851
    %v853 = vrot.slane %v822, %v852
    %v854 = vadd.f32 %v840, %v849
    %v855 = vadd.f32 %v844, %v853
    %vm856 = vcmp.gt.f32.partialorder %v854, 0.0
    %vm857 = vcmp.gt.f32.partialorder %v855, 0.0
    %v858 = vmul.f32 %v854, 0.2
    %v859 = vmul.f32 %v855, 0.2
    %v860 = vsel %vm856, %v854, %v858
    %v861 = vsel %vm857, %v855, %v859
    %v862 = vsel %vm20, %v860, -9e+15
    %v863 = vsel %vm21, %v861, -9e+15
    %v864 = vsel %vm206, %v862, -inf
    %865 = vmax.xlane.f32.xlu0 %v864
    %v866 = vpop.xlane.xlu0 %865
    %v867 = vsel %vm206, %v863, -inf
    %868 = vmax.xlane.f32.xlu0 %v867
    %v869 = vpop.xlane.xlu0 %868
    %v870 = vsub.f32 %v862, %v866
    %v871 = vsub.f32 %v863, %v869
    %v872 = vmul.f32 %v870, 1.442695
    %v873 = vpow.pop %v872
    %v874 = vmul.f32 %v871, 1.442695
    %v875 = vpow.pop %v874
    %v876 = vsel %vm206, %v873, 0.0
    %877 = vadd.xlane.f32.xlu0 %v876
    %v878 = vpop.xlane.xlu0 %877
    %v879 = vsel %vm206, %v875, 0.0
    %880 = vadd.xlane.f32.xlu0 %v879
    %v881 = vpop.xlane.xlu0 %880
    %v882 = vrcp.pop %v878
    %v883 = vrcp.pop %v881
    %884 = vxpose.xlu0.b32.start [1/16] %v758, 128
    %885 = vxpose.xlu0.b32.cont [2/16] 0.0, 128
    %886 = vxpose.xlu0.b32.cont [3/16] 0.0, 128
    %887 = vxpose.xlu0.b32.cont [4/16] 0.0, 128
    %888 = vxpose.xlu0.b32.cont [5/16] 0.0, 128
    %889 = vxpose.xlu0.b32.cont [6/16] 0.0, 128
    %890 = vxpose.xlu0.b32.cont [7/16] 0.0, 128
    %891 = vxpose.xlu0.b32.cont [8/16] 0.0, 128
    %892 = vxpose.xlu0.b32.cont [9/16] 0.0, 128
    %893 = vxpose.xlu0.b32.cont [10/16] 0.0, 128
    %894 = vxpose.xlu0.b32.cont [11/16] 0.0, 128
    %895 = vxpose.xlu0.b32.cont [12/16] 0.0, 128
    %896 = vxpose.xlu0.b32.cont [13/16] 0.0, 128
    %897 = vxpose.xlu0.b32.cont [14/16] 0.0, 128
    %898 = vxpose.xlu0.b32.cont [15/16] 0.0, 128
    %899 = vxpose.xlu0.b32.end [16/16] 0.0, 128
    %v900 = vpop.trf.xlu0
    %v901 = vpop.trf.xlu0
    %v902 = vpop.trf.xlu0
    %v903 = vpop.trf.xlu0
    %v904 = vpop.trf.xlu0
    %v905 = vpop.trf.xlu0
    %v906 = vpop.trf.xlu0
    %v907 = vpop.trf.xlu0
    %v908 = vpop.trf.xlu0
    %v909 = vpop.trf.xlu0
    %v910 = vpop.trf.xlu0
    %v911 = vpop.trf.xlu0
    %v912 = vpop.trf.xlu0
    %v913 = vpop.trf.xlu0
    %v914 = vpop.trf.xlu0
    %v915 = vpop.trf.xlu0
    %916 = vxpose.xlu0.b32.start [1/16] %v763, 128
    %917 = vxpose.xlu0.b32.cont [2/16] 0.0, 128
    %918 = vxpose.xlu0.b32.cont [3/16] 0.0, 128
    %919 = vxpose.xlu0.b32.cont [4/16] 0.0, 128
    %920 = vxpose.xlu0.b32.cont [5/16] 0.0, 128
    %921 = vxpose.xlu0.b32.cont [6/16] 0.0, 128
    %922 = vxpose.xlu0.b32.cont [7/16] 0.0, 128
    %923 = vxpose.xlu0.b32.cont [8/16] 0.0, 128
    %924 = vxpose.xlu0.b32.cont [9/16] 0.0, 128
    %925 = vxpose.xlu0.b32.cont [10/16] 0.0, 128
    %926 = vxpose.xlu0.b32.cont [11/16] 0.0, 128
    %927 = vxpose.xlu0.b32.cont [12/16] 0.0, 128
    %928 = vxpose.xlu0.b32.cont [13/16] 0.0, 128
    %929 = vxpose.xlu0.b32.cont [14/16] 0.0, 128
    %930 = vxpose.xlu0.b32.cont [15/16] 0.0, 128
    %931 = vxpose.xlu0.b32.end [16/16] 0.0, 128
    %v932 = vpop.trf.xlu0
    %v933 = vpop.trf.xlu0
    %v934 = vpop.trf.xlu0
    %v935 = vpop.trf.xlu0
    %v936 = vpop.trf.xlu0
    %v937 = vpop.trf.xlu0
    %v938 = vpop.trf.xlu0
    %v939 = vpop.trf.xlu0
    %v940 = vpop.trf.xlu0
    %v941 = vpop.trf.xlu0
    %v942 = vpop.trf.xlu0
    %v943 = vpop.trf.xlu0
    %v944 = vpop.trf.xlu0
    %v945 = vpop.trf.xlu0
    %v946 = vpop.trf.xlu0
    %v947 = vpop.trf.xlu0
    %v948 = vlaneseq
    %v949 = vshrl.u32 %v948, 7
    %v950 = vsub.s32 0, %v949
    %v951 = vrot.slane %v900, %v950
    %v952 = vlaneseq
    %v953 = vshrl.u32 %v952, 7
    %v954 = vsub.s32 0, %v953
    %v955 = vrot.slane %v932, %v954
    %v956 = vmul.f32 %v873, %v951
    %v957 = vmul.f32 %v875, %v955
    %v958 = vsel %vm206, %v956, 0.0
    %959 = vadd.xlane.f32.xlu0 %v958
    %v960 = vpop.xlane.xlu0 %959
    %v961 = vsel %vm206, %v957, 0.0
    %962 = vadd.xlane.f32.xlu0 %v961
    %v963 = vpop.xlane.xlu0 %962
    %v964 = vmul.f32 %v960, %v882
    %v965 = vmul.f32 %v963, %v883
    %966 = vxpose.xlu0.b32.start [1/16] %v964, 128
    %967 = vxpose.xlu0.b32.cont [2/16] 0.0, 128
    %968 = vxpose.xlu0.b32.cont [3/16] 0.0, 128
    %969 = vxpose.xlu0.b32.cont [4/16] 0.0, 128
    %970 = vxpose.xlu0.b32.cont [5/16] 0.0, 128
    %971 = vxpose.xlu0.b32.cont [6/16] 0.0, 128
    %972 = vxpose.xlu0.b32.cont [7/16] 0.0, 128
    %973 = vxpose.xlu0.b32.cont [8/16] 0.0, 128
    %974 = vxpose.xlu0.b32.cont [9/16] 0.0, 128
    %975 = vxpose.xlu0.b32.cont [10/16] 0.0, 128
    %976 = vxpose.xlu0.b32.cont [11/16] 0.0, 128
    %977 = vxpose.xlu0.b32.cont [12/16] 0.0, 128
    %978 = vxpose.xlu0.b32.cont [13/16] 0.0, 128
    %979 = vxpose.xlu0.b32.cont [14/16] 0.0, 128
    %980 = vxpose.xlu0.b32.cont [15/16] 0.0, 128
    %981 = vxpose.xlu0.b32.end [16/16] 0.0, 128
    %v982 = vpop.trf.xlu0
    %v983 = vpop.trf.xlu0
    %v984 = vpop.trf.xlu0
    %v985 = vpop.trf.xlu0
    %v986 = vpop.trf.xlu0
    %v987 = vpop.trf.xlu0
    %v988 = vpop.trf.xlu0
    %v989 = vpop.trf.xlu0
    %v990 = vpop.trf.xlu0
    %v991 = vpop.trf.xlu0
    %v992 = vpop.trf.xlu0
    %v993 = vpop.trf.xlu0
    %v994 = vpop.trf.xlu0
    %v995 = vpop.trf.xlu0
    %v996 = vpop.trf.xlu0
    %v997 = vpop.trf.xlu0
    %998 = vxpose.xlu0.b32.start [1/16] %v965, 128
    %999 = vxpose.xlu0.b32.cont [2/16] 0.0, 128
    %1000 = vxpose.xlu0.b32.cont [3/16] 0.0, 128
    %1001 = vxpose.xlu0.b32.cont [4/16] 0.0, 128
    %1002 = vxpose.xlu0.b32.cont [5/16] 0.0, 128
    %1003 = vxpose.xlu0.b32.cont [6/16] 0.0, 128
    %1004 = vxpose.xlu0.b32.cont [7/16] 0.0, 128
    %1005 = vxpose.xlu0.b32.cont [8/16] 0.0, 128
    %1006 = vxpose.xlu0.b32.cont [9/16] 0.0, 128
    %1007 = vxpose.xlu0.b32.cont [10/16] 0.0, 128
    %1008 = vxpose.xlu0.b32.cont [11/16] 0.0, 128
    %1009 = vxpose.xlu0.b32.cont [12/16] 0.0, 128
    %1010 = vxpose.xlu0.b32.cont [13/16] 0.0, 128
    %1011 = vxpose.xlu0.b32.cont [14/16] 0.0, 128
    %1012 = vxpose.xlu0.b32.cont [15/16] 0.0, 128
    %1013 = vxpose.xlu0.b32.end [16/16] 0.0, 128
    %v1014 = vpop.trf.xlu0
    %v1015 = vpop.trf.xlu0
    %v1016 = vpop.trf.xlu0
    %v1017 = vpop.trf.xlu0
    %v1018 = vpop.trf.xlu0
    %v1019 = vpop.trf.xlu0
    %v1020 = vpop.trf.xlu0
    %v1021 = vpop.trf.xlu0
    %v1022 = vpop.trf.xlu0
    %v1023 = vpop.trf.xlu0
    %v1024 = vpop.trf.xlu0
    %v1025 = vpop.trf.xlu0
    %v1026 = vpop.trf.xlu0
    %v1027 = vpop.trf.xlu0
    %v1028 = vpop.trf.xlu0
    %v1029 = vpop.trf.xlu0
    %v1032 = vrot.slane %v1014, 7
    %vm1033 = vcmask 1041409
    %v1034 = vsel %vm1033, %v1032, %v982
    %vm1036 = vcmask 58368
    %1037 = vst.msk [vmem:[#allocation2] sm:$0x3] %vm1036, %v1034
    // Predicated region
    $region18: #{tpu_custom_call.1} parent=1 // pred_check
      _
    $region19: #{tpu_custom_call.1} parent=1 // pred_check_branch
      %1039 = sbr.rel (0) target = $region21
    $region20: #{tpu_custom_call.1} parent=1 // pred_region
      %s1041 = ssub.s32 32, 32
      %1042 = vsyncadd [#allocation3], %s1041
      %s1044 = sshll.u32 [#allocation2], 4
      %s1045 = int_to_ptr.vmem [resolvable:$true] %s1044
      %1047 = dma.vmem_to_hbm [thread:$0]  %s1045, 32, %s4, [#allocation3]
    $region21: #{tpu_custom_call.1} parent=1 // pred_fallthru
      _
    // Predicated region
    $region22: #{tpu_custom_call.1} parent=1 // pred_check
      _
    $region23: #{tpu_custom_call.1} parent=1 // pred_check_branch
      %1049 = sbr.rel (0) target = $region25
    $region24: #{tpu_custom_call.1} parent=1 // pred_region
      %1050 = dma.done [#allocation3], 32
    $region25: #{tpu_custom_call.1} parent=1 // pred_fallthru
      _
    %1051 = vsyncpa [#allocation3], 1

</llo_original>
